<compile_context>
chip_gen: v7x
topology: tpu7x:2x2x1
jax: 0.10.0
libtpu: 0.0.40
codegen_flags: <defaults>
</compile_context>

<pallas_src>
import functools

import jax
import jax.numpy as jnp
from jax.experimental import pallas as pl
from jax.experimental.pallas import tpu as pltpu

_MIB = 1024 * 1024
_TARGET_BLOCK_BYTES = 2 * _MIB   # ~2 MiB per streamed input block


def _round_up(a, b):
    return (a + b - 1) // b * b


def _rmsnorm_swish_gate_kernel(x_ref, o_ref, w_ref, y_ref, *, eps):
    # x_ref, o_ref, y_ref: (tm, N) tiles; w_ref: (1, N) float32.
    x = x_ref[...].astype(jnp.float32)
    o = o_ref[...].astype(jnp.float32)
    w = w_ref[...]                       # already float32, broadcasts over rows

    n = x.shape[-1]                      # true feature width (no padding used)
    var = jnp.sum(x * x, axis=-1, keepdims=True) * (1.0 / n)
    rstd = jax.lax.rsqrt(var + eps)

    # Single fused elementwise chain.  NOTE: on a ragged tail block (M % tm),
    # rows beyond M hold stale data; any garbage (even inf/NaN) they produce
    # here is dropped by Pallas's masked tail store, so outputs stay correct.
    out = (x * w) * rstd * (o * jax.nn.sigmoid(o))
    y_ref[...] = out.astype(y_ref.dtype)


def fused_rms_norm_swish_gate(x, o, weight, eps=1e-5):
    """Forward of FusedRMSNormSwishGate (elementwise_affine=True, no bias)."""
    assert x.shape == o.shape
    orig_shape = x.shape
    N = x.shape[-1]
    assert weight.shape == (N,)

    x2 = x.reshape(-1, N)
    o2 = o.reshape(-1, N)
    M = x2.shape[0]
    # Pre-cast the (small) weight once so the kernel does no per-step cast.
    w2 = weight.astype(jnp.float32).reshape(1, N)

    itemsize = jnp.dtype(x.dtype).itemsize
    # Sublane packing: 8 rows for 4-byte, 16 for 2-byte, 32 for 1-byte dtypes.
    row_pack = max(8, 32 // max(1, itemsize))

    # ---- Row tile: ~2 MiB per input block (bandwidth-saturation knee). ----
    row_bytes = max(1, N * itemsize)
    tm = (_TARGET_BLOCK_BYTES // row_bytes) // row_pack * row_pack
    tm = max(row_pack, tm)
    tm = min(tm, _round_up(M, row_pack))            # never exceed the row count
    # Keep >= ~2 grid steps when M allows it so double-buffering overlaps DMA
    # with compute (realistic M gives long grids anyway at 2 MiB blocks, which
    # also lets v7x's two TensorCores share the work).
    tm = min(tm, max(row_pack, _round_up(pl.cdiv(M, 2), row_pack)))

    grid = (pl.cdiv(M, tm),)

    # ---- VMEM scoped limit: x/o/y double-buffered tiles + ~6 full-tile f32
    # temporaries + weight, with 2x headroom; clamp to <= 48 MiB (v7x safe). --
    tile_bytes = tm * N * itemsize
    vmem_est = 3 * 2 * tile_bytes + 6 * tm * N * 4 + N * 4
    vmem_limit = int(min(48 * _MIB, max(32 * _MIB, 2 * vmem_est)))

    # ---- Advisory cost estimate for XLA scheduling around the custom call. --
    cost = pl.CostEstimate(
        flops=8 * M * N,
        transcendentals=M * N,                       # sigmoid
        bytes_accessed=3 * M * N * itemsize + N * 4,
    )

    kernel = functools.partial(_rmsnorm_swish_gate_kernel, eps=float(eps))

    def _run(dim_semantics):
        y2 = pl.pallas_call(
            kernel,
            out_shape=jax.ShapeDtypeStruct((M, N), x.dtype),
            grid_spec=pltpu.PrefetchScalarGridSpec(
                num_scalar_prefetch=0,
                grid=grid,
                in_specs=[
                    pl.BlockSpec((tm, N), lambda i: (i, 0)),   # x rows tile
                    pl.BlockSpec((tm, N), lambda i: (i, 0)),   # o rows tile
                    pl.BlockSpec((1, N), lambda i: (0, 0)),    # weight (invariant)
                ],
                out_specs=pl.BlockSpec((tm, N), lambda i: (i, 0)),
            ),
            compiler_params=pltpu.CompilerParams(
                dimension_semantics=dim_semantics,
                vmem_limit_bytes=vmem_limit,
            ),
            cost_estimate=cost,
        )(x2, o2, w2)
        return jax.block_until_ready(y2)

    # Prefer CORE_PARALLEL on the row axis so v7x's two TensorCores both
    # stream (plain "parallel" vs "arbitrary" has ~zero measured effect);
    # fall back to "parallel" if this chip / JAX build rejects it.
    try:
        y2 = _run((pltpu.CORE_PARALLEL,))
    except Exception:
        y2 = _run(("parallel",))

    return y2.reshape(orig_shape)


def _reference(x, o, weight, eps=1e-5):
    xf = x.astype(jnp.float32)
    of = o.astype(jnp.float32)
    wf = weight.astype(jnp.float32)
    var = jnp.mean(xf * xf, axis=-1, keepdims=True)
    xhat = xf * jax.lax.rsqrt(var + eps)
    y = xhat * wf
    out = y * of * jax.nn.sigmoid(of)
    return out.astype(x.dtype)


if __name__ == "__main__":
    eps = 1e-5  # FusedRMSNormSwishGate default

    key = jax.random.PRNGKey(0)

    # Test 1: (batch, seq, hidden) with hidden=32 — exercises the unpadded
    # (full last dim) block path for N that is not a multiple of 128.
    batch, seq, hidden = 2, 8, 32
    k1, k2, k3, key = jax.random.split(key, 4)
    x = jax.random.normal(k1, (batch, seq, hidden), dtype=jnp.float32)
    o = jax.random.normal(k2, (batch, seq, hidden), dtype=jnp.float32)
    weight = 1.0 + 0.1 * jax.random.normal(k3, (hidden,), dtype=jnp.float32)

    y = fused_rms_norm_swish_gate(x, o, weight, eps=eps)
    jax.block_until_ready(y)
    y_ref = _reference(x, o, weight, eps=eps)
    assert jnp.allclose(y, y_ref, atol=1e-5, rtol=1e-5), "mismatch vs reference (test 1)"

    # Test 2: row count not divisible by the tile (ragged M tail) and a
    # lane-aligned hidden size.
    batch2, seq2, hidden2 = 3, 5, 128
    k4, k5, k6, key = jax.random.split(key, 4)
    x2 = jax.random.normal(k4, (batch2, seq2, hidden2), dtype=jnp.float32)
    o2 = jax.random.normal(k5, (batch2, seq2, hidden2), dtype=jnp.float32)
    w2 = 1.0 + 0.1 * jax.random.normal(k6, (hidden2,), dtype=jnp.float32)

    y2 = fused_rms_norm_swish_gate(x2, o2, w2, eps=eps)
    jax.block_until_ready(y2)
    y2_ref = _reference(x2, o2, w2, eps=eps)
    assert jnp.allclose(y2, y2_ref, atol=1e-5, rtol=1e-5), "mismatch vs reference (test 2)"

    # Test 3: bfloat16 inputs (f32 math inside, cast back on store).
    batch3, seq3, hidden3 = 2, 8, 256
    k7, k8, key = jax.random.split(key, 3)
    x3 = jax.random.normal(k7, (batch3, seq3, hidden3), dtype=jnp.float32).astype(jnp.bfloat16)
    o3 = jax.random.normal(k8, (batch3, seq3, hidden3), dtype=jnp.float32).astype(jnp.bfloat16)
    w3 = jnp.ones((hidden3,), dtype=jnp.bfloat16)

    y3 = fused_rms_norm_swish_gate(x3, o3, w3, eps=eps)
    jax.block_until_ready(y3)
    y3_ref = _reference(x3, o3, w3, eps=eps)
    assert jnp.allclose(y3.astype(jnp.float32), y3_ref.astype(jnp.float32),
                        atol=2e-2, rtol=2e-2), "mismatch vs reference (test 3)"

    print("KERNEL_OK")
</pallas_src>

<mosaic_0001>
module attributes {stable_mosaic.version = 11 : i64} {
  func.func @_rmsnorm_swish_gate_kernel(%arg0: i32, %arg1: memref<8x32xf32, #tpu.memory_space<vmem>>, %arg2: memref<8x32xf32, #tpu.memory_space<vmem>>, %arg3: memref<1x32xf32, #tpu.memory_space<vmem>>, %arg4: memref<8x32xf32, #tpu.memory_space<vmem>>) attributes {dimension_semantics = [#tpu.dimension_semantics<core_parallel>], iteration_bounds = array<i64: 2>, scalar_prefetch = 0 : i64, scratch_operands = 0 : i64, tpu.core_type = #tpu.core_type<tc>, window_params = [{transform_indices = @transform_0, window_bounds = array<i64: 8, 32>}, {transform_indices = @transform_1, window_bounds = array<i64: 8, 32>}, {pipeline_mode = #tpu.pipeline_mode<synchronous>, transform_indices = @transform_2, window_bounds = array<i64: 1, 32>}, {transform_indices = @transform_3, window_bounds = array<i64: 8, 32>}]} {
    %c0 = arith.constant 0 : index
    %c0_0 = arith.constant 0 : index
    %0 = vector.load %arg1[%c0, %c0_0] : memref<8x32xf32, #tpu.memory_space<vmem>>, vector<8x32xf32>
    %c0_1 = arith.constant 0 : index
    %c0_2 = arith.constant 0 : index
    %1 = vector.load %arg2[%c0_1, %c0_2] : memref<8x32xf32, #tpu.memory_space<vmem>>, vector<8x32xf32>
    %c0_3 = arith.constant 0 : index
    %c0_4 = arith.constant 0 : index
    %2 = vector.load %arg3[%c0_3, %c0_4] : memref<1x32xf32, #tpu.memory_space<vmem>>, vector<1x32xf32>
    %3 = arith.mulf %0, %0 : vector<8x32xf32>
    %cst = arith.constant dense<0.000000e+00> : vector<8xf32>
    %4 = vector.multi_reduction <add>, %3, %cst [1] : vector<8x32xf32> to vector<8xf32>
    %5 = vector.shape_cast %4 : vector<8xf32> to vector<8x1xf32>
    %cst_5 = arith.constant 3.125000e-02 : f32
    %6 = vector.broadcast %cst_5 : f32 to vector<8x1xf32>
    %7 = arith.mulf %5, %6 : vector<8x1xf32>
    %cst_6 = arith.constant 9.99999974E-6 : f32
    %8 = vector.broadcast %cst_6 : f32 to vector<8x1xf32>
    %9 = arith.addf %7, %8 : vector<8x1xf32>
    %10 = math.rsqrt %9 : vector<8x1xf32>
    %11 = vector.broadcast %2 : vector<1x32xf32> to vector<8x32xf32>
    %12 = arith.mulf %0, %11 : vector<8x32xf32>
    %13 = vector.broadcast %10 : vector<8x1xf32> to vector<8x32xf32>
    %14 = arith.mulf %12, %13 : vector<8x32xf32>
    %15 = arith.negf %1 : vector<8x32xf32>
    %16 = math.exp %15 : vector<8x32xf32>
    %cst_7 = arith.constant 1.000000e+00 : f32
    %17 = vector.broadcast %cst_7 : f32 to vector<8x32xf32>
    %18 = arith.addf %17, %16 : vector<8x32xf32>
    %19 = arith.divf %17, %18 : vector<8x32xf32>
    %20 = arith.mulf %1, %19 : vector<8x32xf32>
    %21 = arith.mulf %14, %20 : vector<8x32xf32>
    %c0_8 = arith.constant 0 : index
    %c0_9 = arith.constant 0 : index
    %22 = vector.load %arg4[%c0_8, %c0_9] : memref<8x32xf32, #tpu.memory_space<vmem>>, vector<8x32xf32>
    tpu.vector_store %arg4[%c0_8, %c0_9], %21 {strides = array<i32>} : memref<8x32xf32, #tpu.memory_space<vmem>>, vector<8x32xf32>,
    return
  }
  func.func @transform_0(%arg0: i32) -> (i32, i32) {
    %c0_i32 = arith.constant 0 : i32
    %c0_i32_0 = arith.constant 0 : i32
    return %arg0, %c0_i32 : i32, i32
  }
  func.func @transform_1(%arg0: i32) -> (i32, i32) {
    %c0_i32 = arith.constant 0 : i32
    %c0_i32_0 = arith.constant 0 : i32
    return %arg0, %c0_i32 : i32, i32
  }
  func.func @transform_2(%arg0: i32) -> (i32, i32) {
    %c0_i32 = arith.constant 0 : i32
    %c0_i32_0 = arith.constant 0 : i32
    %c0_i32_1 = arith.constant 0 : i32
    return %c0_i32, %c0_i32_0 : i32, i32
  }
  func.func @transform_3(%arg0: i32) -> (i32, i32) {
    %c0_i32 = arith.constant 0 : i32
    %c0_i32_0 = arith.constant 0 : i32
    return %arg0, %c0_i32 : i32, i32
  }
}

module attributes {stable_mosaic.version = 11 : i64} {
  func.func @_rmsnorm_swish_gate_kernel(%arg0: i32, %arg1: memref<8x32xf32, #tpu.memory_space<vmem>>, %arg2: memref<8x32xf32, #tpu.memory_space<vmem>>, %arg3: memref<1x32xf32, #tpu.memory_space<vmem>>, %arg4: memref<8x32xf32, #tpu.memory_space<vmem>>) attributes {dimension_semantics = [#tpu.dimension_semantics<parallel>], iteration_bounds = array<i64: 2>, scalar_prefetch = 0 : i64, scratch_operands = 0 : i64, tpu.core_type = #tpu.core_type<tc>, window_params = [{transform_indices = @transform_0, window_bounds = array<i64: 8, 32>}, {transform_indices = @transform_1, window_bounds = array<i64: 8, 32>}, {pipeline_mode = #tpu.pipeline_mode<synchronous>, transform_indices = @transform_2, window_bounds = array<i64: 1, 32>}, {transform_indices = @transform_3, window_bounds = array<i64: 8, 32>}]} {
    %c0 = arith.constant 0 : index
    %c0_0 = arith.constant 0 : index
    %0 = vector.load %arg1[%c0, %c0_0] : memref<8x32xf32, #tpu.memory_space<vmem>>, vector<8x32xf32>
    %c0_1 = arith.constant 0 : index
    %c0_2 = arith.constant 0 : index
    %1 = vector.load %arg2[%c0_1, %c0_2] : memref<8x32xf32, #tpu.memory_space<vmem>>, vector<8x32xf32>
    %c0_3 = arith.constant 0 : index
    %c0_4 = arith.constant 0 : index
    %2 = vector.load %arg3[%c0_3, %c0_4] : memref<1x32xf32, #tpu.memory_space<vmem>>, vector<1x32xf32>
    %3 = arith.mulf %0, %0 : vector<8x32xf32>
    %cst = arith.constant dense<0.000000e+00> : vector<8xf32>
    %4 = vector.multi_reduction <add>, %3, %cst [1] : vector<8x32xf32> to vector<8xf32>
    %5 = vector.shape_cast %4 : vector<8xf32> to vector<8x1xf32>
    %cst_5 = arith.constant 3.125000e-02 : f32
    %6 = vector.broadcast %cst_5 : f32 to vector<8x1xf32>
    %7 = arith.mulf %5, %6 : vector<8x1xf32>
    %cst_6 = arith.constant 9.99999974E-6 : f32
    %8 = vector.broadcast %cst_6 : f32 to vector<8x1xf32>
    %9 = arith.addf %7, %8 : vector<8x1xf32>
    %10 = math.rsqrt %9 : vector<8x1xf32>
    %11 = vector.broadcast %2 : vector<1x32xf32> to vector<8x32xf32>
    %12 = arith.mulf %0, %11 : vector<8x32xf32>
    %13 = vector.broadcast %10 : vector<8x1xf32> to vector<8x32xf32>
    %14 = arith.mulf %12, %13 : vector<8x32xf32>
    %15 = arith.negf %1 : vector<8x32xf32>
    %16 = math.exp %15 : vector<8x32xf32>
    %cst_7 = arith.constant 1.000000e+00 : f32
    %17 = vector.broadcast %cst_7 : f32 to vector<8x32xf32>
    %18 = arith.addf %17, %16 : vector<8x32xf32>
    %19 = arith.divf %17, %18 : vector<8x32xf32>
    %20 = arith.mulf %1, %19 : vector<8x32xf32>
    %21 = arith.mulf %14, %20 : vector<8x32xf32>
    %c0_8 = arith.constant 0 : index
    %c0_9 = arith.constant 0 : index
    %22 = vector.load %arg4[%c0_8, %c0_9] : memref<8x32xf32, #tpu.memory_space<vmem>>, vector<8x32xf32>
    tpu.vector_store %arg4[%c0_8, %c0_9], %21 {strides = array<i32>} : memref<8x32xf32, #tpu.memory_space<vmem>>, vector<8x32xf32>,
    return
  }
  func.func @transform_0(%arg0: i32) -> (i32, i32) {
    %c0_i32 = arith.constant 0 : i32
    %c0_i32_0 = arith.constant 0 : i32
    return %arg0, %c0_i32 : i32, i32
  }
  func.func @transform_1(%arg0: i32) -> (i32, i32) {
    %c0_i32 = arith.constant 0 : i32
    %c0_i32_0 = arith.constant 0 : i32
    return %arg0, %c0_i32 : i32, i32
  }
  func.func @transform_2(%arg0: i32) -> (i32, i32) {
    %c0_i32 = arith.constant 0 : i32
    %c0_i32_0 = arith.constant 0 : i32
    %c0_i32_1 = arith.constant 0 : i32
    return %c0_i32, %c0_i32_0 : i32, i32
  }
  func.func @transform_3(%arg0: i32) -> (i32, i32) {
    %c0_i32 = arith.constant 0 : i32
    %c0_i32_0 = arith.constant 0 : i32
    return %arg0, %c0_i32 : i32, i32
  }
}

</mosaic_0001>

<llo_original>
// kernel: tpu_custom_call.1
$region0: #{tpu_custom_call.1}
  #allocation0 [shape = 'u32[]', space=smem, size = 0x4, offset = 0x4, fixed_abs, tag = 'smem constant byte address 0x4 - core index']
  #allocation1 [shape = 'u32[144,128]{1,0:T(1,128)}', space=vmem, size = 0x12000, scoped, tag = 'internal scratch']
  %s0 = inlined_call_operand.hbm [shape: f32[16,32], index: 0, kind: input, shape index: {}]
  %s1 = inlined_call_operand.hbm [shape: f32[16,32], index: 1, kind: input, shape index: {}]
  %s2 = inlined_call_operand.vmem [shape: f32[1,32], index: 2, kind: input, shape index: {}]
  %s3 = inlined_call_operand.hbm [shape: f32[16,32], index: 3, kind: output, shape index: {}]
  %s4 = sld [smem:[#allocation0]]
  $region53: #{tpu_custom_call.1} parent=0
    _
  %s6 = ssub.s32 1, %s4
  %s7 = scalar_select 0, %s6, %s4
  $region1: #{tpu_custom_call.1} parent=0
    #allocation2 [shape = 'u8[8192]{0}', space=vmem, size = 0x2000, scoped, tag = 'input window, operand 0']
    #allocation3 [shape = 's32[2]{0}', space=sflag, size = 0x8, scoped, tag = 'scoped memory for tpu_custom_call.1']
    #allocation4 [shape = 's32[2]{0}', space=sflag, size = 0x8, scoped, tag = 'scoped memory for tpu_custom_call.1']
    #allocation5 [shape = 'u8[8192]{0}', space=vmem, size = 0x2000, scoped, tag = 'input window, operand 1']
    #allocation6 [shape = 's32[2]{0}', space=sflag, size = 0x8, scoped, tag = 'scoped memory for tpu_custom_call.1']
    #allocation7 [shape = 'u8[8192]{0}', space=vmem, size = 0x2000, scoped, tag = 'output window, operand 0']
    %8 = vsyncpa [#allocation3], 0
    %s9 = scalar_lea.sflag [#allocation3], 1
    %10 = vsyncpa %s9, 0
    %11 = vsyncpa [#allocation6], 0
    %s12 = scalar_lea.sflag [#allocation6], 1
    %13 = vsyncpa %s12, 0
    %14 = vsyncpa [#allocation4], 0
    %s15 = scalar_lea.sflag [#allocation4], 1
    %16 = vsyncpa %s15, 0
    loop: start=0, step=1, limit=4
    $region2: #{tpu_custom_call.1} parent=1 // loop_pre_header
      _
    $region3: #{tpu_custom_call.1} parent=1 // loop_header
      %s18 = sphi 0, %s22
      %p19 = scmp.ge.s32.totalorder %s18, 4
      %s28 = sphi 0, %s30
      %s31 = sphi 0, %s28
      %s32 = sphi 0, %s31
      %s48 = sphi 0, %s32
      %s54 = sphi 0, %s56
      %s57 = sphi 0, %s54
      %s58 = sphi 0, %s57
      %s74 = sphi 0, %s58
      %s78 = sphi 0, %s78
      %s80 = sphi 0, %s78
      %s81 = sphi 0, %s80
      %s95 = sphi 0, %s81
      %s101 = sphi 0, %s103
      %s104 = sphi 0, %s101
      %s105 = sphi 0, %s104
      %s121 = sphi 0, %s105
    $region4: #{tpu_custom_call.1} parent=1 // loop_header_branch
      %21 = sbr.rel (%p19) target = $region8
    $region5: #{tpu_custom_call.1} parent=1 // loop_body
      %s23 = ssub.s32 %s18, 1
      %s24 = ssub.s32 %s18, 2
      %s25 = sadd.s32 %s18, 1
      %s26 = ssub.s32 %s18, %s25
      %p27 = scmp.eq.s32.totalorder %s26, 0
      %s29 = sadd.s32 %s28, 1
      %s30 = scalar_select %p27, %s28, %s29
      %p33 = pneg %p27
      %p34 = scmp.eq.s32.totalorder %s18, 1
      %p35 = por %p33, %p34
      %p36 = scmp.ne.s32.totalorder %s28, %s31
      %p37 = scmp.eq.s32.totalorder %s18, 0
      %p38 = por %p36, %p37
      %p39 = scmp.ne.s32.totalorder %s28, %s31
      %p40 = scmp.eq.s32.totalorder %s23, 1
      %p41 = por %p39, %p40
      %p42 = scmp.ne.s32.totalorder %s31, %s32
      %p43 = scmp.eq.s32.totalorder %s23, 0
      %p44 = por %p42, %p43
      %p45 = scmp.ne.s32.totalorder %s31, %s32
      %p46 = scmp.eq.s32.totalorder %s24, 1
      %p47 = por %p45, %p46
      %p49 = scmp.ne.s32.totalorder %s32, %s48
      %p50 = scmp.eq.s32.totalorder %s24, 0
      %p51 = por %p49, %p50
      %s52 = ssub.s32 %s18, %s25
      %p53 = scmp.eq.s32.totalorder %s52, 0
      %s55 = sadd.s32 %s54, 1
      %s56 = scalar_select %p53, %s54, %s55
      %p59 = pneg %p53
      %p60 = scmp.eq.s32.totalorder %s18, 1
      %p61 = por %p59, %p60
      %p62 = scmp.ne.s32.totalorder %s54, %s57
      %p63 = scmp.eq.s32.totalorder %s18, 0
      %p64 = por %p62, %p63
      %p65 = scmp.ne.s32.totalorder %s54, %s57
      %p66 = scmp.eq.s32.totalorder %s23, 1
      %p67 = por %p65, %p66
      %p68 = scmp.ne.s32.totalorder %s57, %s58
      %p69 = scmp.eq.s32.totalorder %s23, 0
      %p70 = por %p68, %p69
      %p71 = scmp.ne.s32.totalorder %s57, %s58
      %p72 = scmp.eq.s32.totalorder %s24, 1
      %p73 = por %p71, %p72
      %p75 = scmp.ne.s32.totalorder %s58, %s74
      %p76 = scmp.eq.s32.totalorder %s24, 0
      %p77 = por %p75, %p76
      %s79 = sadd.s32 %s78, 1
      %p82 = scmp.eq.s32.totalorder %s18, 1
      %p83 = scmp.ne.s32.totalorder %s78, %s80
      %p84 = scmp.eq.s32.totalorder %s18, 0
      %p85 = por %p83, %p84
      %p86 = scmp.ne.s32.totalorder %s78, %s80
      %p87 = scmp.eq.s32.totalorder %s23, 1
      %p88 = por %p86, %p87
      %p89 = scmp.ne.s32.totalorder %s80, %s81
      %p90 = scmp.eq.s32.totalorder %s23, 0
      %p91 = por %p89, %p90
      %p92 = scmp.ne.s32.totalorder %s80, %s81
      %p93 = scmp.eq.s32.totalorder %s24, 1
      %p94 = por %p92, %p93
      %p96 = scmp.ne.s32.totalorder %s81, %s95
      %p97 = scmp.eq.s32.totalorder %s24, 0
      %p98 = por %p96, %p97
      %s99 = ssub.s32 %s18, %s25
      %p100 = scmp.eq.s32.totalorder %s99, 0
      %s102 = sadd.s32 %s101, 1
      %s103 = scalar_select %p100, %s101, %s102
      %p106 = pneg %p100
      %p107 = scmp.eq.s32.totalorder %s18, 1
      %p108 = por %p106, %p107
      %p109 = scmp.ne.s32.totalorder %s101, %s104
      %p110 = scmp.eq.s32.totalorder %s18, 0
      %p111 = por %p109, %p110
      %p112 = scmp.ne.s32.totalorder %s101, %s104
      %p113 = scmp.eq.s32.totalorder %s23, 1
      %p114 = por %p112, %p113
      %p115 = scmp.ne.s32.totalorder %s104, %s105
      %p116 = scmp.eq.s32.totalorder %s23, 0
      %p117 = por %p115, %p116
      %p118 = scmp.ne.s32.totalorder %s104, %s105
      %p119 = scmp.eq.s32.totalorder %s24, 1
      %p120 = por %p118, %p119
      %p122 = scmp.ne.s32.totalorder %s105, %s121
      %p123 = scmp.eq.s32.totalorder %s24, 0
      %p124 = por %p122, %p123
      %p125 = scmp.le.s32.totalorder 1, %s18
      %p126 = scmp.lt.s32.totalorder %s18, 3
      %p127 = pnand %p125, %p126
      %p128 = pneg %p127
      // Predicated region
      $region9: #{tpu_custom_call.1} parent=5 // pred_check
        _
      $region10: #{tpu_custom_call.1} parent=5 // pred_check_branch
        %130 = sbr.rel (%p127) target = $region12
      $region11: #{tpu_custom_call.1} parent=5 // pred_region
        %s131 = ssub.s32 %s18, 1
        // Predicated region
        $region13: #{tpu_custom_call.1} parent=11 // pred_check
          %p132 = pneg %p91
        $region14: #{tpu_custom_call.1} parent=11 // pred_check_branch
          %134 = sbr.rel (%p132) target = $region16
        $region15: #{tpu_custom_call.1} parent=11 // pred_region
          _
        $region16: #{tpu_custom_call.1} parent=11 // pred_fallthru
          _
      $region12: #{tpu_custom_call.1} parent=5 // pred_fallthru
        _
      %p135 = scmp.lt.s32.totalorder %s18, 2
      // Predicated region
      $region17: #{tpu_custom_call.1} parent=5 // pred_check
        %p136 = pneg %p135
      $region18: #{tpu_custom_call.1} parent=5 // pred_check_branch
        %138 = sbr.rel (%p136) target = $region20
      $region19: #{tpu_custom_call.1} parent=5 // pred_region
        // Predicated region
        $region21: #{tpu_custom_call.1} parent=19 // pred_check
          %p139 = pneg %p38
        $region22: #{tpu_custom_call.1} parent=19 // pred_check_branch
          %141 = sbr.rel (%p139) target = $region24
        $region23: #{tpu_custom_call.1} parent=19 // pred_region
          %s142 = sand.u32 %s28, 1
          %s143 = scalar_lea.sflag [#allocation3], %s142
          %s144 = sand.u32 %s28, 1
          %s145 = smul.addr %s144, 8
          %s146 = scalar_lea.vmem [#allocation2], %s145
          %s148 = ssub.s32 128, 128
          %149 = vsyncadd %s143, %s148
          %s150 = smul.addr %s18, 128
          %s151 = scalar_lea.hbm %s0, %s150
          %s153 = sshll.u32 %s146, 4
          %s154 = int_to_ptr.vmem [resolvable:$true] %s153
          %156 = dma.hbm_to_vmem [thread:$0]  %s151, 128, %s154, %s143
        $region24: #{tpu_custom_call.1} parent=19 // pred_fallthru
          _
        // Predicated region
        $region25: #{tpu_custom_call.1} parent=19 // pred_check
          %p157 = pneg %p64
        $region26: #{tpu_custom_call.1} parent=19 // pred_check_branch
          %159 = sbr.rel (%p157) target = $region28
        $region27: #{tpu_custom_call.1} parent=19 // pred_region
          %s160 = sand.u32 %s54, 1
          %s161 = scalar_lea.sflag [#allocation6], %s160
          %s162 = sand.u32 %s54, 1
          %s163 = smul.addr %s162, 8
          %s164 = scalar_lea.vmem [#allocation5], %s163
          %s166 = ssub.s32 128, 128
          %167 = vsyncadd %s161, %s166
          %s168 = smul.addr %s18, 128
          %s169 = scalar_lea.hbm %s1, %s168
          %s171 = sshll.u32 %s164, 4
          %s172 = int_to_ptr.vmem [resolvable:$true] %s171
          %174 = dma.hbm_to_vmem [thread:$0]  %s169, 128, %s172, %s161
        $region28: #{tpu_custom_call.1} parent=19 // pred_fallthru
          _
      $region20: #{tpu_custom_call.1} parent=5 // pred_fallthru
        _
      %p175 = scmp.le.s32.totalorder 1, %s18
      %p176 = scmp.lt.s32.totalorder %s18, 3
      %p177 = pnand %p175, %p176
      %p178 = pneg %p177
      // Predicated region
      $region29: #{tpu_custom_call.1} parent=5 // pred_check
        _
      $region30: #{tpu_custom_call.1} parent=5 // pred_check_branch
        %180 = sbr.rel (%p177) target = $region32
      $region31: #{tpu_custom_call.1} parent=5 // pred_region
        %s181 = ssub.s32 %s18, 1
        %s182 = sand.u32 %s31, 1
        %s183 = scalar_lea.sflag [#allocation3], %s182
        %s184 = sand.u32 %s31, 1
        %s185 = smul.addr %s184, 8
        %s186 = scalar_lea.vmem [#allocation2], %s185
        // Predicated region
        $region33: #{tpu_custom_call.1} parent=31 // pred_check
          %p187 = pneg %p44
        $region34: #{tpu_custom_call.1} parent=31 // pred_check_branch
          %189 = sbr.rel (%p187) target = $region36
        $region35: #{tpu_custom_call.1} parent=31 // pred_region
          %190 = dma.done %s183, 128
        $region36: #{tpu_custom_call.1} parent=31 // pred_fallthru
          _
        %s191 = sand.u32 %s57, 1
        %s192 = scalar_lea.sflag [#allocation6], %s191
        %s193 = sand.u32 %s57, 1
        %s194 = smul.addr %s193, 8
        %s195 = scalar_lea.vmem [#allocation5], %s194
        // Predicated region
        $region37: #{tpu_custom_call.1} parent=31 // pred_check
          %p196 = pneg %p70
        $region38: #{tpu_custom_call.1} parent=31 // pred_check_branch
          %198 = sbr.rel (%p196) target = $region40
        $region39: #{tpu_custom_call.1} parent=31 // pred_region
          %199 = dma.done %s192, 128
        $region40: #{tpu_custom_call.1} parent=31 // pred_fallthru
          _
        %s200 = sand.u32 %s31, 1
        %s201 = scalar_lea.sflag [#allocation3], %s200
        %s202 = sand.u32 %s31, 1
        %s203 = smul.addr %s202, 8
        %s204 = scalar_lea.vmem [#allocation2], %s203
        %p205 = pneg %p44
        %p206 = pneg %p41
        %s207 = sand.u32 %s57, 1
        %s208 = scalar_lea.sflag [#allocation6], %s207
        %s209 = sand.u32 %s57, 1
        %s210 = smul.addr %s209, 8
        %s211 = scalar_lea.vmem [#allocation5], %s210
        %p212 = pneg %p70
        %p213 = pneg %p67
        %p214 = pneg %p91
        %p215 = pneg %p88
        %p216 = pneg %p117
        %p217 = pneg %p114
        %s218 = sand.u32 %s104, 1
        %s219 = scalar_lea.sflag [#allocation4], %s218
        %s220 = sand.u32 %s104, 1
        %s221 = smul.addr %s220, 8
        %s222 = scalar_lea.vmem [#allocation7], %s221
        %v223 = vld [vmem:[%s186] sm:$0xff]
        %v224 = vld [vmem:[%s195] sm:$0xff]
        %v225 = vld [vmem:[%s2] sm:$0x1]
        %v226 = vmul.f32 %v223, %v223
        %vm227 = vcmask 261120
        %v228 = vsel %vm227, %v226, 0.0
        %229 = vadd.xlane.f32.xlu0 %v228
        %v230 = vpop.xlane.xlu0 %229
        %v231 = vmul.f32 %v230, 0.03125
        %v232 = vadd.f32 %v231, 1e-05
        %v233 = vrsqrt.pop %v232
        %v235 = vlaneseq
        %v236 = vshrl.u32 %v235, 7
        %v237 = vsub.s32 0, %v236
        %v238 = vrot.slane %v225, %v237
        %v240 = vmul.f32 %v223, %v238
        %v241 = vmul.f32 %v240, %v233
        %v242 = vxor.u32 %v224, 2147483648
        %v243 = vmul.f32 %v242, 1.442695
        %v244 = vpow.pop %v243
        %v245 = vadd.f32 %v244, 1.0
        %v246 = vrcp.pop %v245
        %v247 = vmul.f32 1.0, %v246
        %v248 = vmul.f32 %v224, %v247
        %v249 = vmul.f32 %v241, %v248
        %250 = vst.msk [vmem:[%s222] sm:$0xff] %vm227, %v249
        %s251 = sand.u32 %s104, 1
        %s252 = scalar_lea.sflag [#allocation4], %s251
        %s253 = sand.u32 %s104, 1
        %s254 = smul.addr %s253, 8
        %s255 = scalar_lea.vmem [#allocation7], %s254
        // Predicated region
        $region41: #{tpu_custom_call.1} parent=31 // pred_check
          %p256 = pneg %p114
        $region42: #{tpu_custom_call.1} parent=31 // pred_check_branch
          %258 = sbr.rel (%p256) target = $region44
        $region43: #{tpu_custom_call.1} parent=31 // pred_region
          %s260 = ssub.s32 128, 128
          %261 = vsyncadd %s252, %s260
          %s262 = smul.addr %s23, 128
          %s263 = scalar_lea.hbm %s3, %s262
          %s265 = sshll.u32 %s255, 4
          %s266 = int_to_ptr.vmem [resolvable:$true] %s265
          %268 = dma.vmem_to_hbm [thread:$0]  %s266, 128, %s263, %s252
        $region44: #{tpu_custom_call.1} parent=31 // pred_fallthru
          _
      $region32: #{tpu_custom_call.1} parent=5 // pred_fallthru
        _
      %p269 = scmp.le.s32.totalorder 2, %s18
      // Predicated region
      $region45: #{tpu_custom_call.1} parent=5 // pred_check
        %p270 = pneg %p269
      $region46: #{tpu_custom_call.1} parent=5 // pred_check_branch
        %272 = sbr.rel (%p270) target = $region48
      $region47: #{tpu_custom_call.1} parent=5 // pred_region
        %s273 = ssub.s32 %s18, 2
        // Predicated region
        $region49: #{tpu_custom_call.1} parent=47 // pred_check
          %p274 = pneg %p120
        $region50: #{tpu_custom_call.1} parent=47 // pred_check_branch
          %276 = sbr.rel (%p274) target = $region52
        $region51: #{tpu_custom_call.1} parent=47 // pred_region
          %s277 = sand.u32 %s105, 1
          %s278 = scalar_lea.sflag [#allocation4], %s277
          %s279 = sand.u32 %s105, 1
          %s280 = smul.addr %s279, 8
          %s281 = scalar_lea.vmem [#allocation7], %s280
          %282 = dma.done %s278, 128
        $region52: #{tpu_custom_call.1} parent=47 // pred_fallthru
          _
      $region48: #{tpu_custom_call.1} parent=5 // pred_fallthru
        _
    $region6: #{tpu_custom_call.1} parent=1 // loop_footer
      %s22 = sadd.s32 1, %s18
    $region7: #{tpu_custom_call.1} parent=1 // loop_footer_branch
      %17 = sbr.rel target = $region3
    $region8: #{tpu_custom_call.1} parent=1 // loop_exit
      _
    %283 = vsyncpa [#allocation3], 1
    %s284 = scalar_lea.sflag [#allocation3], 1
    %285 = vsyncpa %s284, 1
    %286 = vsyncpa [#allocation6], 1
    %s287 = scalar_lea.sflag [#allocation6], 1
    %288 = vsyncpa %s287, 1
    %289 = vsyncpa [#allocation4], 1
    %s290 = scalar_lea.sflag [#allocation4], 1
    %291 = vsyncpa %s290, 1

</llo_original>
